<compile_context>
chip_gen: v7x
topology: tpu7x:2x2x1
jax: 0.10.0
libtpu: 0.0.40
codegen_flags: <defaults>
</compile_context>

<pallas_src>
import jax
import jax.numpy as jnp
from jax.experimental import pallas as pl
from jax.experimental.pallas import tpu as pltpu


# ---------------------------------------------------------------------------
# Hardware query
# ---------------------------------------------------------------------------
def _vmem_budget_bytes():
    """Usable VMEM budget (leave headroom for compiler scratch / fusions).

    ~96 MiB on v5e/v6e (128 MiB physical), ~48 MiB on v7x (64 MiB per TC).
    """
    try:
        cap = pltpu.get_tpu_info().vmem_capacity_bytes
    except Exception:
        cap = 64 * 2**20          # conservative fallback (v7x per-TC)
    return int(cap * 3 // 4)


# ---------------------------------------------------------------------------
# Kernels (plain matmul after the Khatri-Rao fold)
# ---------------------------------------------------------------------------
def _fused_kernel(xt_ref, w_ref, b_ref, o_ref):
    acc = jnp.dot(xt_ref[...], w_ref[...], preferred_element_type=jnp.float32)
    o_ref[...] = (acc + b_ref[...]).astype(o_ref.dtype)


def _fused_kernel_nobias(xt_ref, w_ref, o_ref):
    o_ref[...] = jnp.dot(xt_ref[...], w_ref[...],
                         preferred_element_type=jnp.float32).astype(o_ref.dtype)


def _tiled_kernel(xt_ref, w_ref, b_ref, o_ref):
    # Output block index depends only on (b, j): it stays resident across the
    # trailing reduction axis, so accumulate directly into o_ref (no scratch).
    @pl.when(pl.program_id(2) == 0)
    def _init():
        o_ref[...] = b_ref[...]            # f32 mixed bias, added exactly once
    o_ref[...] += jnp.dot(xt_ref[...], w_ref[...],
                          preferred_element_type=jnp.float32)


def _tiled_kernel_nobias(xt_ref, w_ref, o_ref):
    @pl.when(pl.program_id(2) == 0)
    def _init():
        o_ref[...] = jnp.zeros_like(o_ref)
    o_ref[...] += jnp.dot(xt_ref[...], w_ref[...],
                          preferred_element_type=jnp.float32)


# ---------------------------------------------------------------------------
# Tile selection (VMEM- and B-aware)
# ---------------------------------------------------------------------------
def _pick_tile(dim, preferred, quantum):
    """Largest multiple of `quantum` <= min(preferred, dim) dividing `dim`, else dim."""
    if dim <= quantum or dim % quantum != 0:
        return dim
    tile = (min(preferred, dim) // quantum) * quantum
    while tile >= quantum:
        if dim % tile == 0:
            return tile
        tile -= quantum
    return dim


def _tiled_footprint(tb, tk, tn, in_bytes, w_bytes, has_bias):
    """Double-buffered input blocks + output (+bias) blocks + compiler slack."""
    fp = 2 * (tb * tk * in_bytes + tk * tn * w_bytes) + 2 * tb * tn * 4
    if has_bias:
        fp += 2 * tb * tn * 4
    return fp + (2 << 20)


def _select_tiles(B, KCin, Cout, in_bytes, w_bytes, has_bias, budget):
    b_quantum = 8 if in_bytes >= 4 else 16
    tb_pref, tk_pref, tn_pref = 512, 2048, 1024
    tb = tk = tn = None
    for _ in range(32):
        tb = _pick_tile(B, tb_pref, b_quantum)
        tk = _pick_tile(KCin, tk_pref, 128)
        tn = _pick_tile(Cout, tn_pref, 128)
        if _tiled_footprint(tb, tk, tn, in_bytes, w_bytes, has_bias) <= budget:
            break
        if tk_pref > 128 and tk_pref >= tn_pref:
            tk_pref //= 2
        elif tn_pref > 128:
            tn_pref //= 2
        elif tk_pref > 128:
            tk_pref //= 2
        elif tb_pref > b_quantum:
            tb_pref //= 2
        else:
            break   # unaligned dims fell back to full size; nothing left to shrink
    # Guarantee >=2 blocks on the parallel (b, Cout) axes so v7x's two
    # TensorCores both get work (harmless on 1-TC v5e/v6e).
    if (B // tb) * (Cout // tn) < 2:
        tn2 = _pick_tile(Cout, max(128, tn // 2), 128)
        if tn2 < tn:
            tn = tn2
        else:
            tb2 = _pick_tile(B, max(b_quantum, tb // 2), b_quantum)
            if tb2 < tb:
                tb = tb2
    return tb, tk, tn


# ---------------------------------------------------------------------------
# Fused path: everything fits in VMEM, single gridless kernel invocation.
# ---------------------------------------------------------------------------
def _subspace_linear_fused(xt, bias_mix, w_flat, *, vmem_budget=None):
    B, KCin = xt.shape
    _, Cout = w_flat.shape
    has_bias = bias_mix is not None
    in_bytes = jnp.dtype(xt.dtype).itemsize
    w_bytes = jnp.dtype(w_flat.dtype).itemsize
    budget = vmem_budget if vmem_budget is not None else _vmem_budget_bytes()

    bytes_accessed = (B * KCin * in_bytes + KCin * Cout * w_bytes
                      + (2 if has_bias else 1) * B * Cout * 4)
    fp = bytes_accessed + (2 << 20)
    flops = 2 * B * KCin * Cout

    kernel = _fused_kernel if has_bias else _fused_kernel_nobias
    operands = [xt, w_flat] + ([bias_mix] if has_bias else [])
    return pl.pallas_call(
        kernel,
        out_shape=jax.ShapeDtypeStruct((B, Cout), jnp.float32),
        compiler_params=pltpu.CompilerParams(
            vmem_limit_bytes=int(min(budget, max(fp, 16 * 2**20)))),
        cost_estimate=pl.CostEstimate(flops=flops, transcendentals=0,
                                      bytes_accessed=bytes_accessed),
    )(*operands)


# ---------------------------------------------------------------------------
# Tiled path: production sizes (plain tiled matmul + bias-init accumulator).
# ---------------------------------------------------------------------------
def _subspace_linear_tiled(xt, bias_mix, w_flat, *, tb=None, tk=None, tn=None,
                           vmem_budget=None):
    B, KCin = xt.shape
    _, Cout = w_flat.shape
    has_bias = bias_mix is not None
    in_bytes = jnp.dtype(xt.dtype).itemsize
    w_bytes = jnp.dtype(w_flat.dtype).itemsize
    budget = vmem_budget if vmem_budget is not None else _vmem_budget_bytes()

    atb, atk, atn = _select_tiles(B, KCin, Cout, in_bytes, w_bytes, has_bias, budget)
    tb = tb or atb
    tk = tk or atk
    tn = tn or atn
    assert B % tb == 0 and KCin % tk == 0 and Cout % tn == 0, (
        "TODO(synk): pad unaligned B / K*Cin / Cout to tile multiples instead of asserting")

    grid = (B // tb, Cout // tn, KCin // tk)
    fp = _tiled_footprint(tb, tk, tn, in_bytes, w_bytes, has_bias)
    vmem_limit = int(min(budget, max(fp, 16 * 2**20)))

    in_specs = [
        pl.BlockSpec((tb, tk), lambda b, j, ci: (b, ci)),     # xt     (B, K*Cin)
        # NOTE: pipeline_mode=pl.Buffered(3) on this spec is worth sweeping when
        # weight tiles are small; left at the default depth for portability.
        pl.BlockSpec((tk, tn), lambda b, j, ci: (ci, j)),     # w_flat (K*Cin, Cout)
    ]
    operands = [xt, w_flat]
    if has_bias:
        in_specs.append(pl.BlockSpec((tb, tn), lambda b, j, ci: (b, j)))  # bias (B, Cout)
        operands.append(bias_mix)
        kernel = _tiled_kernel
    else:
        kernel = _tiled_kernel_nobias

    flops = 2 * B * KCin * Cout
    bytes_accessed = (B * KCin * in_bytes + KCin * Cout * w_bytes
                      + (2 if has_bias else 1) * B * Cout * 4)

    return pl.pallas_call(
        kernel,
        out_shape=jax.ShapeDtypeStruct((B, Cout), jnp.float32),
        grid_spec=pltpu.PrefetchScalarGridSpec(
            num_scalar_prefetch=0,
            grid=grid,
            in_specs=in_specs,
            out_specs=pl.BlockSpec((tb, tn), lambda b, j, ci: (b, j)),
        ),
        compiler_params=pltpu.CompilerParams(
            # b and Cout tiles are independent work (v7x megacore can split);
            # the K*Cin axis reduces into the resident output block.
            dimension_semantics=("parallel", "parallel", "arbitrary"),
            vmem_limit_bytes=vmem_limit,
        ),
        cost_estimate=pl.CostEstimate(flops=flops, transcendentals=0,
                                      bytes_accessed=bytes_accessed),
    )(*operands)


# ---------------------------------------------------------------------------
# Public entry points
# ---------------------------------------------------------------------------
def prepare_params(weight, bias=None, *, mxu_dtype=jnp.bfloat16):
    """ONE-TIME parameter prep (call at init, not per forward).

    weight: (K, Cout, Cin) in the PyTorch F.linear layout.
    Returns params with w_flat[(k*Cin)+i, o] == weight[k, o, i] in mxu_dtype and
    bias kept in f32 (elementwise math stays f32; only MXU operands are bf16).
    """
    K, Cout, Cin = weight.shape
    w_flat = jnp.transpose(weight, (0, 2, 1)).reshape(K * Cin, Cout).astype(mxu_dtype)
    b = None if bias is None else jnp.asarray(bias, jnp.float32)
    return {"w_flat": w_flat, "bias": b,
            "n_models": K, "in_channels": Cin, "out_channels": Cout}


def subspace_linear_apply(params, x, t, *, fused_vmem_budget_bytes=None,
                          tb=None, tk=None, tn=None):
    """out[b, o] = sum_k t[b, k] * (x @ weight[k].T + bias[k])[b, o]."""
    w_flat = params["w_flat"]
    bias = params["bias"]
    K, Cin, Cout = params["n_models"], params["in_channels"], params["out_channels"]
    B = x.shape[0]
    assert x.shape == (B, Cin) and t.shape == (B, K)

    xf = x.astype(jnp.float32)
    tf = t.astype(jnp.float32)
    # Khatri-Rao fold of the mixture into the LHS (tiny vs. the weight stream):
    #   xt[b, k*Cin + i] = t[b, k] * x[b, i]
    xt = (tf[:, :, None] * xf[:, None, :]).reshape(B, K * Cin).astype(w_flat.dtype)
    # Bias mixture is a tiny (B,K)@(K,Cout) done in f32 outside the kernel.
    bias_mix = None if bias is None else jnp.dot(
        tf, bias, precision=jax.lax.Precision.HIGHEST)      # (B, Cout) f32

    budget = _vmem_budget_bytes()
    in_bytes = jnp.dtype(w_flat.dtype).itemsize
    footprint = (B * K * Cin * in_bytes + K * Cin * Cout * in_bytes
                 + (2 if bias is not None else 1) * B * Cout * 4)
    fused_budget = (fused_vmem_budget_bytes if fused_vmem_budget_bytes is not None
                    else budget // 4)
    if footprint <= fused_budget and tb is None and tk is None and tn is None:
        return _subspace_linear_fused(xt, bias_mix, w_flat, vmem_budget=budget)
    return _subspace_linear_tiled(xt, bias_mix, w_flat, tb=tb, tk=tk, tn=tn,
                                  vmem_budget=budget)


def subspace_linear(x, t, weight, bias=None, *, mxu_dtype=jnp.bfloat16):
    """Convenience wrapper. Production code should call prepare_params() ONCE
    and reuse the result (hoists the weight transpose/cast out of the hot path)."""
    return subspace_linear_apply(prepare_params(weight, bias, mxu_dtype=mxu_dtype), x, t)


# ---------------------------------------------------------------------------
# Reference + tests
# ---------------------------------------------------------------------------
def xavier_uniform(key, shape, fan_in, fan_out):
    bound = (6.0 / (fan_in + fan_out)) ** 0.5
    return jax.random.uniform(key, shape, jnp.float32, -bound, bound)


def _reference(x, t, weight, bias):
    per_model = jnp.einsum("bi,koi->bko", x, weight,
                           precision=jax.lax.Precision.HIGHEST)
    if bias is not None:
        per_model = per_model + bias[None, :, :]
    return jnp.einsum("bko,bk->bo", per_model, t,
                      precision=jax.lax.Precision.HIGHEST)


if __name__ == "__main__":
    key = jax.random.PRNGKey(0)

    # --- 1) small shapes implied by the module (fused path, f32 params) -----
    K, Cin, Cout, B = 4, 32, 32, 8
    kw, kb, kx, kt, key = jax.random.split(key, 5)
    weight = xavier_uniform(kw, (K, Cout, Cin), Cin, Cout)   # (n_models, out, in)
    bias = xavier_uniform(kb, (K, Cout), Cout, K)            # (n_models, out)
    x = jax.random.normal(kx, (B, Cin), jnp.float32)
    t = jax.nn.softmax(jax.random.normal(kt, (B, K), jnp.float32), axis=-1)

    params_f32 = prepare_params(weight, bias, mxu_dtype=jnp.float32)
    out = jax.block_until_ready(subspace_linear_apply(params_f32, x, t))
    ref = _reference(x, t, weight, bias)
    assert out.shape == (B, Cout)
    assert jnp.allclose(out, ref, atol=1e-3, rtol=1e-3), "fused path mismatch"

    # --- 2) fused path without bias ------------------------------------------
    params_nb = prepare_params(weight, None, mxu_dtype=jnp.float32)
    out_nb = jax.block_until_ready(subspace_linear_apply(params_nb, x, t))
    ref_nb = _reference(x, t, weight, None)
    assert jnp.allclose(out_nb, ref_nb, atol=1e-3, rtol=1e-3), "no-bias fused mismatch"

    # --- 3) tiled (production) path, bf16 MXU operands -----------------------
    K2, Cin2, Cout2, B2 = 3, 256, 384, 16
    kw, kb, kx, kt, key = jax.random.split(key, 5)
    weight2 = xavier_uniform(kw, (K2, Cout2, Cin2), Cin2, Cout2)
    bias2 = xavier_uniform(kb, (K2, Cout2), Cout2, K2)
    x2 = jax.random.normal(kx, (B2, Cin2), jnp.float32)
    t2 = jax.nn.softmax(jax.random.normal(kt, (B2, K2), jnp.float32), axis=-1)
    ref2 = _reference(x2, t2, weight2, bias2)

    params_bf16 = prepare_params(weight2, bias2, mxu_dtype=jnp.bfloat16)
    out2 = jax.block_until_ready(
        subspace_linear_apply(params_bf16, x2, t2, tb=16, tk=256, tn=128))
    assert out2.shape == (B2, Cout2)
    assert jnp.allclose(out2, ref2, atol=2e-2, rtol=2e-2), "tiled bf16 path mismatch"

    # --- 4) tiled path with f32 operands and a batch-tiled grid --------------
    params2_f32 = prepare_params(weight2, bias2, mxu_dtype=jnp.float32)
    out3 = jax.block_until_ready(
        subspace_linear_apply(params2_f32, x2, t2, tb=8, tk=256, tn=128))
    assert jnp.allclose(out3, ref2, atol=1e-3, rtol=1e-3), "tiled f32 path mismatch"

    print("KERNEL_OK")
</pallas_src>

<mosaic_0001>
module attributes {stable_mosaic.version = 11 : i64} {
  func.func @_fused_kernel(%arg0: memref<8x128xf32, #tpu.memory_space<vmem>>, %arg1: memref<128x32xf32, #tpu.memory_space<vmem>>, %arg2: memref<8x32xf32, #tpu.memory_space<vmem>>, %arg3: memref<8x32xf32, #tpu.memory_space<vmem>>) attributes {dimension_semantics = [], scalar_prefetch = 0 : i64, scratch_operands = 0 : i64, tpu.core_type = #tpu.core_type<tc>} {
    %c0 = arith.constant 0 : index
    %c0_0 = arith.constant 0 : index
    %0 = vector.load %arg0[%c0, %c0_0] : memref<8x128xf32, #tpu.memory_space<vmem>>, vector<8x128xf32>
    %c0_1 = arith.constant 0 : index
    %c0_2 = arith.constant 0 : index
    %1 = vector.load %arg1[%c0_1, %c0_2] : memref<128x32xf32, #tpu.memory_space<vmem>>, vector<128x32xf32>
    %cst = arith.constant dense<0.000000e+00> : vector<8x32xf32>
    %2 = tpu.matmul %0, %1, %cst {dimension_numbers = #tpu.dot_dimension_numbers<[1], [0], [0], [1], [0, 0, 1, 1], [], []>} : vector<8x128xf32>, vector<128x32xf32>, vector<8x32xf32> -> vector<8x32xf32>
    %c0_3 = arith.constant 0 : index
    %c0_4 = arith.constant 0 : index
    %3 = vector.load %arg2[%c0_3, %c0_4] : memref<8x32xf32, #tpu.memory_space<vmem>>, vector<8x32xf32>
    %4 = arith.addf %2, %3 : vector<8x32xf32>
    %c0_5 = arith.constant 0 : index
    %c0_6 = arith.constant 0 : index
    %5 = vector.load %arg3[%c0_5, %c0_6] : memref<8x32xf32, #tpu.memory_space<vmem>>, vector<8x32xf32>
    tpu.vector_store %arg3[%c0_5, %c0_6], %4 {strides = array<i32>} : memref<8x32xf32, #tpu.memory_space<vmem>>, vector<8x32xf32>,
    return
  }
}

</mosaic_0001>

<llo_original>
// kernel: tpu_custom_call.1
$region0: #{tpu_custom_call.1}
  #allocation0 [shape = 'u32[]', space=smem, size = 0x4, offset = 0x4, fixed_abs, tag = 'smem constant byte address 0x4 - core index']
  #allocation1 [shape = 'u32[144,128]{1,0:T(1,128)}', space=vmem, size = 0x12000, scoped, tag = 'internal scratch']
  %s0 = inlined_call_operand.vmem [shape: f32[8,128], index: 0, kind: input, shape index: {}]
  %s1 = inlined_call_operand.vmem [shape: f32[128,32], index: 1, kind: input, shape index: {}]
  %s2 = inlined_call_operand.vmem [shape: f32[8,32], index: 2, kind: input, shape index: {}]
  %s3 = inlined_call_operand.hbm [shape: f32[8,32], index: 3, kind: output, shape index: {}]
  %s4 = sld [smem:[#allocation0]]
  $region22: #{tpu_custom_call.1} parent=0
    _
  %s6 = ssub.s32 1, %s4
  %s7 = scalar_select 0, %s6, %s4
  $region1: #{tpu_custom_call.1} parent=0
    #allocation2 [shape = 'u8[4096]{0}', space=vmem, size = 0x1000, scoped, tag = 'output window, operand 0, single buffered']
    #allocation3 [shape = 's32[1]{0}', space=sflag, size = 0x4, scoped, tag = 'scoped memory for tpu_custom_call.1']
    %8 = vsyncpa [#allocation3], 0
    // Predicated region
    $region2: #{tpu_custom_call.1} parent=1 // pred_check
      _
    $region3: #{tpu_custom_call.1} parent=1 // pred_check_branch
      %10 = sbr.rel (0) target = $region5
    $region4: #{tpu_custom_call.1} parent=1 // pred_region
      _
    $region5: #{tpu_custom_call.1} parent=1 // pred_fallthru
      _
    // Predicated region
    $region6: #{tpu_custom_call.1} parent=1 // pred_check
      _
    $region7: #{tpu_custom_call.1} parent=1 // pred_check_branch
      %12 = sbr.rel (0) target = $region9
    $region8: #{tpu_custom_call.1} parent=1 // pred_region
      _
    $region9: #{tpu_custom_call.1} parent=1 // pred_fallthru
      _
    // Predicated region
    $region10: #{tpu_custom_call.1} parent=1 // pred_check
      _
    $region11: #{tpu_custom_call.1} parent=1 // pred_check_branch
      %14 = sbr.rel (0) target = $region13
    $region12: #{tpu_custom_call.1} parent=1 // pred_region
      _
    $region13: #{tpu_custom_call.1} parent=1 // pred_fallthru
      _
    %v15 = vld [vmem:[%s0] sm:$0xff]
    %v16 = vld [vmem:[%s1] sm:$0xff]
    %v17 = vld [vmem:[%s1 + $0x8] sm:$0xff]
    %v18 = vld [vmem:[%s1 + $0x10] sm:$0xff]
    %v19 = vld [vmem:[%s1 + $0x18] sm:$0xff]
    %v20 = vld [vmem:[%s1 + $0x20] sm:$0xff]
    %v21 = vld [vmem:[%s1 + $0x28] sm:$0xff]
    %v22 = vld [vmem:[%s1 + $0x30] sm:$0xff]
    %v23 = vld [vmem:[%s1 + $0x38] sm:$0xff]
    %v24 = vld [vmem:[%s1 + $0x40] sm:$0xff]
    %v25 = vld [vmem:[%s1 + $0x48] sm:$0xff]
    %v26 = vld [vmem:[%s1 + $0x50] sm:$0xff]
    %v27 = vld [vmem:[%s1 + $0x58] sm:$0xff]
    %v28 = vld [vmem:[%s1 + $0x60] sm:$0xff]
    %v29 = vld [vmem:[%s1 + $0x68] sm:$0xff]
    %v30 = vld [vmem:[%s1 + $0x70] sm:$0xff]
    %v31 = vld [vmem:[%s1 + $0x78] sm:$0xff]
    %v32 = vld [vmem:[%s2] sm:$0xff]
    %33 = vmatprep.subr.mxu0 0.0
    %34 = vmatpush1.msra.mxu0 %v16
    %35 = vmatprep.subr.mxu0 0.0
    %36 = vmatpush1.msra.mxu0 %v17
    %37 = vmatprep.subr.mxu0 0.0
    %38 = vmatpush1.msra.mxu0 %v18
    %39 = vmatprep.subr.mxu0 0.0
    %40 = vmatpush1.msra.mxu0 %v19
    %41 = vmatprep.subr.mxu0 0.0
    %42 = vmatpush1.msra.mxu0 %v20
    %43 = vmatprep.subr.mxu0 0.0
    %44 = vmatpush1.msra.mxu0 %v21
    %45 = vmatprep.subr.mxu0 0.0
    %46 = vmatpush1.msra.mxu0 %v22
    %47 = vmatprep.subr.mxu0 0.0
    %48 = vmatpush1.msra.mxu0 %v23
    %49 = vmatprep.subr.mxu0 0.0
    %50 = vmatpush1.msra.mxu0 %v24
    %51 = vmatprep.subr.mxu0 0.0
    %52 = vmatpush1.msra.mxu0 %v25
    %53 = vmatprep.subr.mxu0 0.0
    %54 = vmatpush1.msra.mxu0 %v26
    %55 = vmatprep.subr.mxu0 0.0
    %56 = vmatpush1.msra.mxu0 %v27
    %57 = vmatprep.subr.mxu0 0.0
    %58 = vmatpush1.msra.mxu0 %v28
    %59 = vmatprep.subr.mxu0 0.0
    %60 = vmatpush1.msra.mxu0 %v29
    %61 = vmatprep.subr.mxu0 0.0
    %62 = vmatpush1.msra.mxu0 %v30
    %63 = vmatprep.subr.mxu0 0.0
    %64 = vmatpush1.msra.mxu0 %v31
    %65 = vmatprep.subr.mxu0 0.0
    %66 = vmatpush1.msra.mxu0 0.0
    %67 = vmatprep.subr.mxu0 0.0
    %68 = vmatpush1.msra.mxu0 0.0
    %69 = vmatprep.subr.mxu0 0.0
    %70 = vmatpush1.msra.mxu0 0.0
    %71 = vmatprep.subr.mxu0 0.0
    %72 = vmatpush1.msra.mxu0 0.0
    %73 = vmatprep.subr.mxu0 0.0
    %74 = vmatpush1.msra.mxu0 0.0
    %75 = vmatprep.subr.mxu0 0.0
    %76 = vmatpush1.msra.mxu0 0.0
    %77 = vmatprep.subr.mxu0 0.0
    %78 = vmatpush1.msra.mxu0 0.0
    %79 = vmatprep.subr.mxu0 0.0
    %80 = vmatpush1.msra.mxu0 0.0
    %81 = vmatprep.subr.mxu0 0.0
    %82 = vmatpush1.msra.mxu0 0.0
    %83 = vmatprep.subr.mxu0 0.0
    %84 = vmatpush1.msra.mxu0 0.0
    %85 = vmatprep.subr.mxu0 0.0
    %86 = vmatpush1.msra.mxu0 0.0
    %87 = vmatprep.subr.mxu0 0.0
    %88 = vmatpush1.msra.mxu0 0.0
    %89 = vmatprep.subr.mxu0 0.0
    %90 = vmatpush1.msra.mxu0 0.0
    %91 = vmatprep.subr.mxu0 0.0
    %92 = vmatpush1.msra.mxu0 0.0
    %93 = vmatprep.subr.mxu0 0.0
    %94 = vmatpush1.msra.mxu0 0.0
    %95 = vmatprep.subr.mxu0 0.0
    %96 = vmatpush1.msra.mxu0 0.0
    %97 = vmatprep.mubr.f32.mxu0 0.0
    %98 = vmatmul.mubr.f32.gmra.mrb[0].mxu0 %v15
    %v99 = vpop.f32.mrb[0].mxu0
    %v100 = vadd.f32 %v32, %v99
    %v101 = vpop.f32.mrb[0].mxu0
    %102 = vdwg.mxu0
    %vm103 = vcmask 261120
    %104 = vst.msk [vmem:[#allocation2] sm:$0xff] %vm103, %v100
    // Predicated region
    $region14: #{tpu_custom_call.1} parent=1 // pred_check
      _
    $region15: #{tpu_custom_call.1} parent=1 // pred_check_branch
      %106 = sbr.rel (0) target = $region17
    $region16: #{tpu_custom_call.1} parent=1 // pred_region
      %s108 = ssub.s32 128, 128
      %109 = vsyncadd [#allocation3], %s108
      %s111 = sshll.u32 [#allocation2], 4
      %s112 = int_to_ptr.vmem [resolvable:$true] %s111
      %114 = dma.vmem_to_hbm [thread:$0]  %s112, 128, %s3, [#allocation3]
    $region17: #{tpu_custom_call.1} parent=1 // pred_fallthru
      _
    // Predicated region
    $region18: #{tpu_custom_call.1} parent=1 // pred_check
      _
    $region19: #{tpu_custom_call.1} parent=1 // pred_check_branch
      %116 = sbr.rel (0) target = $region21
    $region20: #{tpu_custom_call.1} parent=1 // pred_region
      %117 = dma.done [#allocation3], 128
    $region21: #{tpu_custom_call.1} parent=1 // pred_fallthru
      _
    %118 = vsyncpa [#allocation3], 1

</llo_original>
